<compile_context>
chip_gen: v7x
topology: tpu7x:2x2x1
jax: 0.10.0
libtpu: 0.0.40
codegen_flags: <defaults>
</compile_context>

<pallas_src>
import functools

import jax
import jax.numpy as jnp
from jax.experimental import pallas as pl
from jax.experimental.pallas import tpu as pltpu

# Static layer dims of the Agent MLP.
IN_FEATURES = 9
H1, H2, H3 = 128, 128, 64
K_PAD = 16         # input features padded 9 -> 16 (clean contraction)
OUT_PAD = 128      # logits padded to one full 128-lane register (lane-dense vst)
BATCH_TILE = 512   # rows per grid step for large batches


def _agent_mlp_kernel(x_ref,
                      w1_ref, b1_ref,
                      w2_ref, b2_ref,
                      w3_ref, b3_ref,
                      w4_ref, b4_ref,
                      out_ref):
    """One batch tile: 4 bf16 matmuls (f32 accumulation) + 3 ReLUs, fused."""
    h = jnp.dot(x_ref[...], w1_ref[...],
                preferred_element_type=jnp.float32) + b1_ref[...]
    h = jnp.maximum(h, 0.0).astype(jnp.bfloat16)

    h = jnp.dot(h, w2_ref[...],
                preferred_element_type=jnp.float32) + b2_ref[...]
    h = jnp.maximum(h, 0.0).astype(jnp.bfloat16)

    h = jnp.dot(h, w3_ref[...],
                preferred_element_type=jnp.float32) + b3_ref[...]
    h = jnp.maximum(h, 0.0).astype(jnp.bfloat16)

    y = jnp.dot(h, w4_ref[...],
                preferred_element_type=jnp.float32) + b4_ref[...]
    # bf16 store halves the dominant (output) HBM stream; wrapper casts back.
    out_ref[...] = y.astype(out_ref.dtype)


def prepare_params(params):
    """Pad + cast (in, out)-layout params for the kernel.  Call ONCE and cache.

    Weights -> bf16 (MXU inputs); biases stay f32 (added after f32
    accumulation).  w1 rows padded 9->16 with zeros; w4/b4 columns padded
    num_actions->128 with zeros so the output store is lane-dense.
    """
    num_actions = params["w4"].shape[1]
    w1 = jnp.pad(params["w1"].astype(jnp.bfloat16),
                 ((0, K_PAD - IN_FEATURES), (0, 0)))
    w2 = params["w2"].astype(jnp.bfloat16)
    w3 = params["w3"].astype(jnp.bfloat16)
    w4 = jnp.pad(params["w4"].astype(jnp.bfloat16),
                 ((0, 0), (0, OUT_PAD - num_actions)))
    b1 = params["b1"].astype(jnp.float32)
    b2 = params["b2"].astype(jnp.float32)
    b3 = params["b3"].astype(jnp.float32)
    b4 = jnp.pad(params["b4"].astype(jnp.float32),
                 ((0, 0), (0, OUT_PAD - num_actions)))
    return dict(w1=w1, b1=b1, w2=w2, b2=b2, w3=w3, b3=b3, w4=w4, b4=b4)


@functools.partial(jax.jit, static_argnames=("num_actions", "batch_tile"))
def agent_forward(x, prepped, *, num_actions, batch_tile=BATCH_TILE):
    """Fused Agent MLP forward.

    x:       (batch, 9) float32
    prepped: output of prepare_params() (padded bf16 weights / f32 biases).
    returns  (batch, num_actions) float32 logits (matches PyTorch reference).
    """
    batch = x.shape[0]

    # Adaptive tile: full 512-row tiles for large rollout batches, but don't
    # pad a batch-of-2 inference call up to 512 rows.
    tile = min(batch_tile, max(8, ((batch + 7) // 8) * 8))
    padded_batch = pl.cdiv(batch, tile) * tile
    grid = (padded_batch // tile,)

    # Single fused pad: batch -> padded_batch rows, 9 -> 16 feature columns
    # (zero-filled so the K=16 contraction is exact).
    xp = jnp.pad(x.astype(jnp.bfloat16),
                 ((0, padded_batch - batch), (0, K_PAD - IN_FEATURES)))

    flops = 2 * padded_batch * (K_PAD * H1 + H1 * H2 + H2 * H3 + H3 * OUT_PAD)
    weight_bytes = (2 * (K_PAD * H1 + H1 * H2 + H2 * H3 + H3 * OUT_PAD)
                    + 4 * (H1 + H2 + H3 + OUT_PAD))
    bytes_accessed = (weight_bytes
                      + padded_batch * K_PAD * 2      # bf16 input stream
                      + padded_batch * OUT_PAD * 2)   # bf16 output stream

    in_specs = [
        pl.BlockSpec((tile, K_PAD), lambda i: (i, 0)),   # x tile (streamed)
        pl.BlockSpec((K_PAD, H1), lambda i: (0, 0)),     # w1 (resident)
        pl.BlockSpec((1, H1), lambda i: (0, 0)),         # b1
        pl.BlockSpec((H1, H2), lambda i: (0, 0)),        # w2
        pl.BlockSpec((1, H2), lambda i: (0, 0)),         # b2
        pl.BlockSpec((H2, H3), lambda i: (0, 0)),        # w3
        pl.BlockSpec((1, H3), lambda i: (0, 0)),         # b3
        pl.BlockSpec((H3, OUT_PAD), lambda i: (0, 0)),   # w4 (padded cols)
        pl.BlockSpec((1, OUT_PAD), lambda i: (0, 0)),    # b4 (padded cols)
    ]
    out_spec = pl.BlockSpec((tile, OUT_PAD), lambda i: (i, 0))

    y_pad = pl.pallas_call(
        _agent_mlp_kernel,
        out_shape=jax.ShapeDtypeStruct((padded_batch, OUT_PAD), jnp.bfloat16),
        grid=grid,
        in_specs=in_specs,
        out_specs=out_spec,
        compiler_params=pltpu.CompilerParams(
            dimension_semantics=("parallel",),
            vmem_limit_bytes=32 * 1024 * 1024,
        ),
        cost_estimate=pl.CostEstimate(
            flops=flops, transcendentals=0, bytes_accessed=bytes_accessed),
    )(xp, prepped["w1"], prepped["b1"], prepped["w2"], prepped["b2"],
      prepped["w3"], prepped["b3"], prepped["w4"], prepped["b4"])

    # Strip batch / lane padding; cast back to f32 to match the PyTorch module.
    return y_pad[:batch, :num_actions].astype(jnp.float32)


def init_params(key, num_actions):
    """Deterministic synthetic init, shapes matching the PyTorch module.

    PyTorch nn.Linear stores weight as (out, in); we store the transpose
    (in, out) so the kernel computes x @ W directly.
    """
    dims = [(IN_FEATURES, H1), (H1, H2), (H2, H3), (H3, num_actions)]
    params = {}
    for i, (fan_in, fan_out) in enumerate(dims, start=1):
        key, kw, kb = jax.random.split(key, 3)
        bound = 1.0 / jnp.sqrt(jnp.float32(fan_in))
        params[f"w{i}"] = jax.random.uniform(
            kw, (fan_in, fan_out), jnp.float32, minval=-bound, maxval=bound)
        params[f"b{i}"] = jax.random.uniform(
            kb, (1, fan_out), jnp.float32, minval=-bound, maxval=bound)
    return params


def agent_forward_ref(x, params):
    """Plain-JAX f32 reference for correctness checking."""
    h = jnp.maximum(x @ params["w1"] + params["b1"], 0.0)
    h = jnp.maximum(h @ params["w2"] + params["b2"], 0.0)
    h = jnp.maximum(h @ params["w3"] + params["b3"], 0.0)
    return h @ params["w4"] + params["b4"]


if __name__ == "__main__":
    num_actions = 8

    key = jax.random.PRNGKey(0)
    key, kx_small, kx_big = jax.random.split(key, 3)
    params = init_params(key, num_actions)

    # Prepare (pad + cast) the weights ONCE; reused across every forward call.
    prepped = prepare_params(params)

    # 1) RL-inference sized call: state vector (blue object xyz + robot pose).
    batch = 2
    x = jax.random.normal(kx_small, (batch, IN_FEATURES), jnp.float32)
    y = agent_forward(x, prepped, num_actions=num_actions)
    y = jax.block_until_ready(y)
    y_ref = agent_forward_ref(x, params)
    assert y.shape == (batch, num_actions)
    # bf16 MXU inputs / bf16 output store with f32 accumulation -> small
    # rounding vs. the f32 reference.
    assert jnp.allclose(y, y_ref, atol=5e-2, rtol=5e-2), "small-batch mismatch"

    # 2) Rollout-sized call: exercises the ragged batch pad + multi-step
    #    "parallel" grid (512-row tiles).
    big_batch = 1040
    xb = jax.random.normal(kx_big, (big_batch, IN_FEATURES), jnp.float32)
    yb = agent_forward(xb, prepped, num_actions=num_actions)
    yb = jax.block_until_ready(yb)
    yb_ref = agent_forward_ref(xb, params)
    assert yb.shape == (big_batch, num_actions)
    assert jnp.allclose(yb, yb_ref, atol=5e-2, rtol=5e-2), "big-batch mismatch"

    print("KERNEL_OK")
</pallas_src>

<mosaic_0001>
module attributes {stable_mosaic.version = 11 : i64} {
  func.func @_agent_mlp_kernel(%arg0: i32, %arg1: memref<8x16xbf16, #tpu.memory_space<vmem>>, %arg2: memref<16x128xbf16, #tpu.memory_space<vmem>>, %arg3: memref<1x128xf32, #tpu.memory_space<vmem>>, %arg4: memref<128x128xbf16, #tpu.memory_space<vmem>>, %arg5: memref<1x128xf32, #tpu.memory_space<vmem>>, %arg6: memref<128x64xbf16, #tpu.memory_space<vmem>>, %arg7: memref<1x64xf32, #tpu.memory_space<vmem>>, %arg8: memref<64x128xbf16, #tpu.memory_space<vmem>>, %arg9: memref<1x128xf32, #tpu.memory_space<vmem>>, %arg10: memref<8x128xbf16, #tpu.memory_space<vmem>>) attributes {dimension_semantics = [#tpu.dimension_semantics<parallel>], iteration_bounds = array<i64: 1>, scalar_prefetch = 0 : i64, scratch_operands = 0 : i64, tpu.core_type = #tpu.core_type<tc>, window_params = [{transform_indices = @transform_0, window_bounds = array<i64: 8, 16>}, {pipeline_mode = #tpu.pipeline_mode<synchronous>, transform_indices = @transform_1, window_bounds = array<i64: 16, 128>}, {pipeline_mode = #tpu.pipeline_mode<synchronous>, transform_indices = @transform_2, window_bounds = array<i64: 1, 128>}, {pipeline_mode = #tpu.pipeline_mode<synchronous>, transform_indices = @transform_3, window_bounds = array<i64: 128, 128>}, {pipeline_mode = #tpu.pipeline_mode<synchronous>, transform_indices = @transform_4, window_bounds = array<i64: 1, 128>}, {pipeline_mode = #tpu.pipeline_mode<synchronous>, transform_indices = @transform_5, window_bounds = array<i64: 128, 64>}, {pipeline_mode = #tpu.pipeline_mode<synchronous>, transform_indices = @transform_6, window_bounds = array<i64: 1, 64>}, {pipeline_mode = #tpu.pipeline_mode<synchronous>, transform_indices = @transform_7, window_bounds = array<i64: 64, 128>}, {pipeline_mode = #tpu.pipeline_mode<synchronous>, transform_indices = @transform_8, window_bounds = array<i64: 1, 128>}, {transform_indices = @transform_9, window_bounds = array<i64: 8, 128>}]} {
    %c0 = arith.constant 0 : index
    %c0_0 = arith.constant 0 : index
    %0 = vector.load %arg1[%c0, %c0_0] : memref<8x16xbf16, #tpu.memory_space<vmem>>, vector<8x16xbf16>
    %c0_1 = arith.constant 0 : index
    %c0_2 = arith.constant 0 : index
    %1 = vector.load %arg2[%c0_1, %c0_2] : memref<16x128xbf16, #tpu.memory_space<vmem>>, vector<16x128xbf16>
    %cst = arith.constant dense<0.000000e+00> : vector<8x128xf32>
    %2 = tpu.matmul %0, %1, %cst {dimension_numbers = #tpu.dot_dimension_numbers<[1], [0], [0], [1], [0, 0, 1, 1], [], []>} : vector<8x16xbf16>, vector<16x128xbf16>, vector<8x128xf32> -> vector<8x128xf32>
    %c0_3 = arith.constant 0 : index
    %c0_4 = arith.constant 0 : index
    %3 = vector.load %arg3[%c0_3, %c0_4] : memref<1x128xf32, #tpu.memory_space<vmem>>, vector<1x128xf32>
    %4 = vector.broadcast %3 : vector<1x128xf32> to vector<8x128xf32>
    %5 = arith.addf %2, %4 : vector<8x128xf32>
    %cst_5 = arith.constant 0.000000e+00 : f32
    %6 = vector.broadcast %cst_5 : f32 to vector<8x128xf32>
    %7 = arith.maximumf %5, %6 : vector<8x128xf32>
    %8 = arith.truncf %7 : vector<8x128xf32> to vector<8x128xbf16>
    %c0_6 = arith.constant 0 : index
    %c0_7 = arith.constant 0 : index
    %9 = vector.load %arg4[%c0_6, %c0_7] : memref<128x128xbf16, #tpu.memory_space<vmem>>, vector<128x128xbf16>
    %cst_8 = arith.constant dense<0.000000e+00> : vector<8x128xf32>
    %10 = tpu.matmul %8, %9, %cst_8 {dimension_numbers = #tpu.dot_dimension_numbers<[1], [0], [0], [1], [0, 0, 1, 1], [], []>} : vector<8x128xbf16>, vector<128x128xbf16>, vector<8x128xf32> -> vector<8x128xf32>
    %c0_9 = arith.constant 0 : index
    %c0_10 = arith.constant 0 : index
    %11 = vector.load %arg5[%c0_9, %c0_10] : memref<1x128xf32, #tpu.memory_space<vmem>>, vector<1x128xf32>
    %12 = vector.broadcast %11 : vector<1x128xf32> to vector<8x128xf32>
    %13 = arith.addf %10, %12 : vector<8x128xf32>
    %cst_11 = arith.constant 0.000000e+00 : f32
    %14 = vector.broadcast %cst_11 : f32 to vector<8x128xf32>
    %15 = arith.maximumf %13, %14 : vector<8x128xf32>
    %16 = arith.truncf %15 : vector<8x128xf32> to vector<8x128xbf16>
    %c0_12 = arith.constant 0 : index
    %c0_13 = arith.constant 0 : index
    %17 = vector.load %arg6[%c0_12, %c0_13] : memref<128x64xbf16, #tpu.memory_space<vmem>>, vector<128x64xbf16>
    %cst_14 = arith.constant dense<0.000000e+00> : vector<8x64xf32>
    %18 = tpu.matmul %16, %17, %cst_14 {dimension_numbers = #tpu.dot_dimension_numbers<[1], [0], [0], [1], [0, 0, 1, 1], [], []>} : vector<8x128xbf16>, vector<128x64xbf16>, vector<8x64xf32> -> vector<8x64xf32>
    %c0_15 = arith.constant 0 : index
    %c0_16 = arith.constant 0 : index
    %19 = vector.load %arg7[%c0_15, %c0_16] : memref<1x64xf32, #tpu.memory_space<vmem>>, vector<1x64xf32>
    %20 = vector.broadcast %19 : vector<1x64xf32> to vector<8x64xf32>
    %21 = arith.addf %18, %20 : vector<8x64xf32>
    %cst_17 = arith.constant 0.000000e+00 : f32
    %22 = vector.broadcast %cst_17 : f32 to vector<8x64xf32>
    %23 = arith.maximumf %21, %22 : vector<8x64xf32>
    %24 = arith.truncf %23 : vector<8x64xf32> to vector<8x64xbf16>
    %c0_18 = arith.constant 0 : index
    %c0_19 = arith.constant 0 : index
    %25 = vector.load %arg8[%c0_18, %c0_19] : memref<64x128xbf16, #tpu.memory_space<vmem>>, vector<64x128xbf16>
    %cst_20 = arith.constant dense<0.000000e+00> : vector<8x128xf32>
    %26 = tpu.matmul %24, %25, %cst_20 {dimension_numbers = #tpu.dot_dimension_numbers<[1], [0], [0], [1], [0, 0, 1, 1], [], []>} : vector<8x64xbf16>, vector<64x128xbf16>, vector<8x128xf32> -> vector<8x128xf32>
    %c0_21 = arith.constant 0 : index
    %c0_22 = arith.constant 0 : index
    %27 = vector.load %arg9[%c0_21, %c0_22] : memref<1x128xf32, #tpu.memory_space<vmem>>, vector<1x128xf32>
    %28 = vector.broadcast %27 : vector<1x128xf32> to vector<8x128xf32>
    %29 = arith.addf %26, %28 : vector<8x128xf32>
    %30 = arith.truncf %29 : vector<8x128xf32> to vector<8x128xbf16>
    %c0_23 = arith.constant 0 : index
    %c0_24 = arith.constant 0 : index
    %31 = vector.load %arg10[%c0_23, %c0_24] : memref<8x128xbf16, #tpu.memory_space<vmem>>, vector<8x128xbf16>
    tpu.vector_store %arg10[%c0_23, %c0_24], %30 {strides = array<i32>} : memref<8x128xbf16, #tpu.memory_space<vmem>>, vector<8x128xbf16>,
    return
  }
  func.func @transform_0(%arg0: i32) -> (i32, i32) {
    %c0_i32 = arith.constant 0 : i32
    %c0_i32_0 = arith.constant 0 : i32
    return %arg0, %c0_i32 : i32, i32
  }
  func.func @transform_1(%arg0: i32) -> (i32, i32) {
    %c0_i32 = arith.constant 0 : i32
    %c0_i32_0 = arith.constant 0 : i32
    %c0_i32_1 = arith.constant 0 : i32
    return %c0_i32, %c0_i32_0 : i32, i32
  }
  func.func @transform_2(%arg0: i32) -> (i32, i32) {
    %c0_i32 = arith.constant 0 : i32
    %c0_i32_0 = arith.constant 0 : i32
    %c0_i32_1 = arith.constant 0 : i32
    return %c0_i32, %c0_i32_0 : i32, i32
  }
  func.func @transform_3(%arg0: i32) -> (i32, i32) {
    %c0_i32 = arith.constant 0 : i32
    %c0_i32_0 = arith.constant 0 : i32
    %c0_i32_1 = arith.constant 0 : i32
    return %c0_i32, %c0_i32_0 : i32, i32
  }
  func.func @transform_4(%arg0: i32) -> (i32, i32) {
    %c0_i32 = arith.constant 0 : i32
    %c0_i32_0 = arith.constant 0 : i32
    %c0_i32_1 = arith.constant 0 : i32
    return %c0_i32, %c0_i32_0 : i32, i32
  }
  func.func @transform_5(%arg0: i32) -> (i32, i32) {
    %c0_i32 = arith.constant 0 : i32
    %c0_i32_0 = arith.constant 0 : i32
    %c0_i32_1 = arith.constant 0 : i32
    return %c0_i32, %c0_i32_0 : i32, i32
  }
  func.func @transform_6(%arg0: i32) -> (i32, i32) {
    %c0_i32 = arith.constant 0 : i32
    %c0_i32_0 = arith.constant 0 : i32
    %c0_i32_1 = arith.constant 0 : i32
    return %c0_i32, %c0_i32_0 : i32, i32
  }
  func.func @transform_7(%arg0: i32) -> (i32, i32) {
    %c0_i32 = arith.constant 0 : i32
    %c0_i32_0 = arith.constant 0 : i32
    %c0_i32_1 = arith.constant 0 : i32
    return %c0_i32, %c0_i32_0 : i32, i32
  }
  func.func @transform_8(%arg0: i32) -> (i32, i32) {
    %c0_i32 = arith.constant 0 : i32
    %c0_i32_0 = arith.constant 0 : i32
    %c0_i32_1 = arith.constant 0 : i32
    return %c0_i32, %c0_i32_0 : i32, i32
  }
  func.func @transform_9(%arg0: i32) -> (i32, i32) {
    %c0_i32 = arith.constant 0 : i32
    %c0_i32_0 = arith.constant 0 : i32
    return %arg0, %c0_i32 : i32, i32
  }
}

</mosaic_0001>

<llo_original>
// kernel: agent_forward.1
$region0: #{agent_forward.1}
  #allocation0 [shape = 'u32[]', space=smem, size = 0x4, offset = 0x4, fixed_abs, tag = 'smem constant byte address 0x4 - core index']
  #allocation1 [shape = 'u32[144,128]{1,0:T(1,128)}', space=vmem, size = 0x12000, scoped, tag = 'internal scratch']
  %s0 = inlined_call_operand.vmem [shape: bf16[8,16], index: 0, kind: input, shape index: {}]
  %s1 = inlined_call_operand.hbm [shape: bf16[16,128], index: 1, kind: input, shape index: {}]
  %s2 = inlined_call_operand.vmem [shape: f32[1,128], index: 2, kind: input, shape index: {}]
  %s3 = inlined_call_operand.vmem [shape: bf16[128,128], index: 3, kind: input, shape index: {}]
  %s4 = inlined_call_operand.vmem [shape: f32[1,128], index: 4, kind: input, shape index: {}]
  %s5 = inlined_call_operand.vmem [shape: bf16[128,64], index: 5, kind: input, shape index: {}]
  %s6 = inlined_call_operand.vmem [shape: f32[1,64], index: 6, kind: input, shape index: {}]
  %s7 = inlined_call_operand.vmem [shape: bf16[64,128], index: 7, kind: input, shape index: {}]
  %s8 = inlined_call_operand.vmem [shape: f32[1,128], index: 8, kind: input, shape index: {}]
  %s9 = inlined_call_operand.vmem [shape: bf16[8,128], index: 9, kind: output, shape index: {}]
  %s10 = sld [smem:[#allocation0]]
  $region50: #{agent_forward.1} parent=0
    _
  %s12 = ssub.s32 1, %s10
  %s13 = scalar_select 0, %s12, %s10
  $region1: #{agent_forward.1} parent=0
    #allocation2 [shape = 'u8[4096]{0}', space=vmem, size = 0x1000, scoped, tag = 'input window, operand 1, single buffered']
    #allocation3 [shape = 's32[1]{0}', space=sflag, size = 0x4, scoped, tag = 'scoped memory for agent_forward.1']
    %14 = vsyncpa [#allocation3], 0
    // Predicated region
    $region2: #{agent_forward.1} parent=1 // pred_check
      _
    $region3: #{agent_forward.1} parent=1 // pred_check_branch
      %16 = sbr.rel (0) target = $region5
    $region4: #{agent_forward.1} parent=1 // pred_region
      _
    $region5: #{agent_forward.1} parent=1 // pred_fallthru
      _
    // Predicated region
    $region6: #{agent_forward.1} parent=1 // pred_check
      _
    $region7: #{agent_forward.1} parent=1 // pred_check_branch
      %18 = sbr.rel (0) target = $region9
    $region8: #{agent_forward.1} parent=1 // pred_region
      %s20 = ssub.s32 128, 128
      %21 = vsyncadd [#allocation3], %s20
      %s22 = sshll.u32 [#allocation2], 4
      %s23 = int_to_ptr.vmem [resolvable:$true] %s22
      %28 = dma.hbm_to_vmem [thread:$0]  %s1, 128, %s23, [#allocation3], 64, 64, 4
    $region9: #{agent_forward.1} parent=1 // pred_fallthru
      _
    // Predicated region
    $region10: #{agent_forward.1} parent=1 // pred_check
      _
    $region11: #{agent_forward.1} parent=1 // pred_check_branch
      %30 = sbr.rel (0) target = $region13
    $region12: #{agent_forward.1} parent=1 // pred_region
      _
    $region13: #{agent_forward.1} parent=1 // pred_fallthru
      _
    // Predicated region
    $region14: #{agent_forward.1} parent=1 // pred_check
      _
    $region15: #{agent_forward.1} parent=1 // pred_check_branch
      %32 = sbr.rel (0) target = $region17
    $region16: #{agent_forward.1} parent=1 // pred_region
      _
    $region17: #{agent_forward.1} parent=1 // pred_fallthru
      _
    // Predicated region
    $region18: #{agent_forward.1} parent=1 // pred_check
      _
    $region19: #{agent_forward.1} parent=1 // pred_check_branch
      %34 = sbr.rel (0) target = $region21
    $region20: #{agent_forward.1} parent=1 // pred_region
      _
    $region21: #{agent_forward.1} parent=1 // pred_fallthru
      _
    // Predicated region
    $region22: #{agent_forward.1} parent=1 // pred_check
      _
    $region23: #{agent_forward.1} parent=1 // pred_check_branch
      %36 = sbr.rel (0) target = $region25
    $region24: #{agent_forward.1} parent=1 // pred_region
      _
    $region25: #{agent_forward.1} parent=1 // pred_fallthru
      _
    // Predicated region
    $region26: #{agent_forward.1} parent=1 // pred_check
      _
    $region27: #{agent_forward.1} parent=1 // pred_check_branch
      %38 = sbr.rel (0) target = $region29
    $region28: #{agent_forward.1} parent=1 // pred_region
      _
    $region29: #{agent_forward.1} parent=1 // pred_fallthru
      _
    // Predicated region
    $region30: #{agent_forward.1} parent=1 // pred_check
      _
    $region31: #{agent_forward.1} parent=1 // pred_check_branch
      %40 = sbr.rel (0) target = $region33
    $region32: #{agent_forward.1} parent=1 // pred_region
      _
    $region33: #{agent_forward.1} parent=1 // pred_fallthru
      _
    // Predicated region
    $region34: #{agent_forward.1} parent=1 // pred_check
      _
    $region35: #{agent_forward.1} parent=1 // pred_check_branch
      %42 = sbr.rel (0) target = $region37
    $region36: #{agent_forward.1} parent=1 // pred_region
      _
    $region37: #{agent_forward.1} parent=1 // pred_fallthru
      _
    // Predicated region
    $region38: #{agent_forward.1} parent=1 // pred_check
      _
    $region39: #{agent_forward.1} parent=1 // pred_check_branch
      %44 = sbr.rel (0) target = $region41
    $region40: #{agent_forward.1} parent=1 // pred_region
      %45 = dma.done [#allocation3], 128
    $region41: #{agent_forward.1} parent=1 // pred_fallthru
      _
    %v47 = vld [vmem:[%s0] sm:$0xf]
    %v48 = vld [vmem:[#allocation2] sm:$0xf]
    %v49 = vld [vmem:[#allocation2 + $0x4] sm:$0xf]
    %v50 = vld [vmem:[%s2] sm:$0x1]
    %v52 = vlaneseq
    %v53 = vshrl.u32 %v52, 7
    %v54 = vsub.s32 0, %v53
    %v55 = vrot.slane %v50, %v54
    %v59 = vunpack.c.l.b16 %v48
    %v60 = vunpack.c.l.b16 %v49
    %v61 = vpack.c.b16 %v60, %v59
    %vm63 = vcmask 130048
    %v65 = vsel %vm63, %v47, 0
    %67 = vmatprep.subr.bf16.mxu0 0
    %68 = vmatpush1.bf16.msra.mxu0 %v61
    %69 = vmatprep.subr.bf16.mxu0 0
    %70 = vmatpush1.bf16.msra.mxu0 0
    %71 = vmatprep.subr.bf16.mxu0 0
    %72 = vmatpush1.bf16.msra.mxu0 0
    %73 = vmatprep.subr.bf16.mxu0 0
    %74 = vmatpush1.bf16.msra.mxu0 0
    %75 = vmatprep.subr.bf16.mxu0 0
    %76 = vmatpush1.bf16.msra.mxu0 0
    %77 = vmatprep.subr.bf16.mxu0 0
    %78 = vmatpush1.bf16.msra.mxu0 0
    %79 = vmatprep.subr.bf16.mxu0 0
    %80 = vmatpush1.bf16.msra.mxu0 0
    %81 = vmatprep.subr.bf16.mxu0 0
    %82 = vmatpush1.bf16.msra.mxu0 0
    %83 = vmatprep.subr.bf16.mxu0 0
    %84 = vmatpush1.bf16.msra.mxu0 0
    %85 = vmatprep.subr.bf16.mxu0 0
    %86 = vmatpush1.bf16.msra.mxu0 0
    %87 = vmatprep.subr.bf16.mxu0 0
    %88 = vmatpush1.bf16.msra.mxu0 0
    %89 = vmatprep.subr.bf16.mxu0 0
    %90 = vmatpush1.bf16.msra.mxu0 0
    %91 = vmatprep.subr.bf16.mxu0 0
    %92 = vmatpush1.bf16.msra.mxu0 0
    %93 = vmatprep.subr.bf16.mxu0 0
    %94 = vmatpush1.bf16.msra.mxu0 0
    %95 = vmatprep.subr.bf16.mxu0 0
    %96 = vmatpush1.bf16.msra.mxu0 0
    %97 = vmatprep.subr.bf16.mxu0 0
    %98 = vmatpush1.bf16.msra.mxu0 0
    %99 = vmatprep.mubr.bf16.mxu0 0
    %100 = vmatmul.mubr.bf16.gmra.mrb[0].mxu0 %v65
    %v101 = vpop.f32.mrb[0].mxu0
    %v102 = vadd.f32 %v55, %v101
    %v103 = vpop.f32.mrb[0].mxu0
    %v104 = vpop.f32.mrb[0].mxu0
    %v105 = vpop.f32.mrb[0].mxu0
    %106 = vdwg.mxu0
    %v107 = vmax.f32 %v102, 0.0
    %v108 = vpack.c.bf16 %v107, %v107
    %v109 = vld [vmem:[%s3] sm:$0xf]
    %v110 = vld [vmem:[%s3 + $0x4] sm:$0xf]
    %v111 = vld [vmem:[%s3 + $0x8] sm:$0xf]
    %v112 = vld [vmem:[%s3 + $0xc] sm:$0xf]
    %v113 = vld [vmem:[%s3 + $0x10] sm:$0xf]
    %v114 = vld [vmem:[%s3 + $0x14] sm:$0xf]
    %v115 = vld [vmem:[%s3 + $0x18] sm:$0xf]
    %v116 = vld [vmem:[%s3 + $0x1c] sm:$0xf]
    %v117 = vld [vmem:[%s3 + $0x20] sm:$0xf]
    %v118 = vld [vmem:[%s3 + $0x24] sm:$0xf]
    %v119 = vld [vmem:[%s3 + $0x28] sm:$0xf]
    %v120 = vld [vmem:[%s3 + $0x2c] sm:$0xf]
    %v121 = vld [vmem:[%s3 + $0x30] sm:$0xf]
    %v122 = vld [vmem:[%s3 + $0x34] sm:$0xf]
    %v123 = vld [vmem:[%s3 + $0x38] sm:$0xf]
    %v124 = vld [vmem:[%s3 + $0x3c] sm:$0xf]
    %v125 = vld [vmem:[%s4] sm:$0x1]
    %v127 = vlaneseq
    %v128 = vshrl.u32 %v127, 7
    %v129 = vsub.s32 0, %v128
    %v130 = vrot.slane %v125, %v129
    %v148 = vunpack.c.l.b16 %v109
    %v149 = vunpack.c.l.b16 %v110
    %v150 = vunpack.c.l.b16 %v111
    %v151 = vunpack.c.l.b16 %v112
    %v152 = vunpack.c.l.b16 %v113
    %v153 = vunpack.c.l.b16 %v114
    %v154 = vunpack.c.l.b16 %v115
    %v155 = vunpack.c.l.b16 %v116
    %v156 = vunpack.c.l.b16 %v117
    %v157 = vunpack.c.l.b16 %v118
    %v158 = vunpack.c.l.b16 %v119
    %v159 = vunpack.c.l.b16 %v120
    %v160 = vunpack.c.l.b16 %v121
    %v161 = vunpack.c.l.b16 %v122
    %v162 = vunpack.c.l.b16 %v123
    %v163 = vunpack.c.l.b16 %v124
    %v164 = vpack.c.b16 %v149, %v148
    %v165 = vpack.c.b16 %v151, %v150
    %v166 = vpack.c.b16 %v153, %v152
    %v167 = vpack.c.b16 %v155, %v154
    %v168 = vpack.c.b16 %v157, %v156
    %v169 = vpack.c.b16 %v159, %v158
    %v170 = vpack.c.b16 %v161, %v160
    %v171 = vpack.c.b16 %v163, %v162
    %180 = vmatprep.subr.bf16.mxu0 0
    %181 = vmatpush1.bf16.msra.mxu0 %v164
    %182 = vmatprep.subr.bf16.mxu0 0
    %183 = vmatpush1.bf16.msra.mxu0 %v165
    %184 = vmatprep.subr.bf16.mxu0 0
    %185 = vmatpush1.bf16.msra.mxu0 %v166
    %186 = vmatprep.subr.bf16.mxu0 0
    %187 = vmatpush1.bf16.msra.mxu0 %v167
    %188 = vmatprep.subr.bf16.mxu0 0
    %189 = vmatpush1.bf16.msra.mxu0 %v168
    %190 = vmatprep.subr.bf16.mxu0 0
    %191 = vmatpush1.bf16.msra.mxu0 %v169
    %192 = vmatprep.subr.bf16.mxu0 0
    %193 = vmatpush1.bf16.msra.mxu0 %v170
    %194 = vmatprep.subr.bf16.mxu0 0
    %195 = vmatpush1.bf16.msra.mxu0 %v171
    %196 = vmatprep.subr.bf16.mxu0 0
    %197 = vmatpush1.bf16.msra.mxu0 0
    %198 = vmatprep.subr.bf16.mxu0 0
    %199 = vmatpush1.bf16.msra.mxu0 0
    %200 = vmatprep.subr.bf16.mxu0 0
    %201 = vmatpush1.bf16.msra.mxu0 0
    %202 = vmatprep.subr.bf16.mxu0 0
    %203 = vmatpush1.bf16.msra.mxu0 0
    %204 = vmatprep.subr.bf16.mxu0 0
    %205 = vmatpush1.bf16.msra.mxu0 0
    %206 = vmatprep.subr.bf16.mxu0 0
    %207 = vmatpush1.bf16.msra.mxu0 0
    %208 = vmatprep.subr.bf16.mxu0 0
    %209 = vmatpush1.bf16.msra.mxu0 0
    %210 = vmatprep.subr.bf16.mxu0 0
    %211 = vmatpush1.bf16.msra.mxu0 0
    %212 = vmatprep.mubr.bf16.mxu0 0
    %213 = vmatmul.mubr.bf16.gmra.mrb[0].mxu0 %v108
    %v214 = vpop.f32.mrb[0].mxu0
    %v215 = vadd.f32 %v130, %v214
    %v216 = vpop.f32.mrb[0].mxu0
    %v217 = vpop.f32.mrb[0].mxu0
    %v218 = vpop.f32.mrb[0].mxu0
    %219 = vdwg.mxu0
    %v220 = vmax.f32 %v215, 0.0
    %v221 = vpack.c.bf16 %v220, %v220
    %v222 = vld [vmem:[%s5] sm:$0xf]
    %v223 = vld [vmem:[%s5 + $0x4] sm:$0xf]
    %v224 = vld [vmem:[%s5 + $0x8] sm:$0xf]
    %v225 = vld [vmem:[%s5 + $0xc] sm:$0xf]
    %v226 = vld [vmem:[%s5 + $0x10] sm:$0xf]
    %v227 = vld [vmem:[%s5 + $0x14] sm:$0xf]
    %v228 = vld [vmem:[%s5 + $0x18] sm:$0xf]
    %v229 = vld [vmem:[%s5 + $0x1c] sm:$0xf]
    %v230 = vld [vmem:[%s5 + $0x20] sm:$0xf]
    %v231 = vld [vmem:[%s5 + $0x24] sm:$0xf]
    %v232 = vld [vmem:[%s5 + $0x28] sm:$0xf]
    %v233 = vld [vmem:[%s5 + $0x2c] sm:$0xf]
    %v234 = vld [vmem:[%s5 + $0x30] sm:$0xf]
    %v235 = vld [vmem:[%s5 + $0x34] sm:$0xf]
    %v236 = vld [vmem:[%s5 + $0x38] sm:$0xf]
    %v237 = vld [vmem:[%s5 + $0x3c] sm:$0xf]
    %v238 = vld [vmem:[%s6] sm:$0x1]
    %v240 = vlaneseq
    %v241 = vshrl.u32 %v240, 7
    %v242 = vsub.s32 0, %v241
    %v243 = vrot.slane %v238, %v242
    %v261 = vunpack.c.l.b16 %v222
    %v262 = vunpack.c.l.b16 %v223
    %v263 = vunpack.c.l.b16 %v224
    %v264 = vunpack.c.l.b16 %v225
    %v265 = vunpack.c.l.b16 %v226
    %v266 = vunpack.c.l.b16 %v227
    %v267 = vunpack.c.l.b16 %v228
    %v268 = vunpack.c.l.b16 %v229
    %v269 = vunpack.c.l.b16 %v230
    %v270 = vunpack.c.l.b16 %v231
    %v271 = vunpack.c.l.b16 %v232
    %v272 = vunpack.c.l.b16 %v233
    %v273 = vunpack.c.l.b16 %v234
    %v274 = vunpack.c.l.b16 %v235
    %v275 = vunpack.c.l.b16 %v236
    %v276 = vunpack.c.l.b16 %v237
    %v277 = vpack.c.b16 %v262, %v261
    %v278 = vpack.c.b16 %v264, %v263
    %v279 = vpack.c.b16 %v266, %v265
    %v280 = vpack.c.b16 %v268, %v267
    %v281 = vpack.c.b16 %v270, %v269
    %v282 = vpack.c.b16 %v272, %v271
    %v283 = vpack.c.b16 %v274, %v273
    %v284 = vpack.c.b16 %v276, %v275
    %293 = vmatprep.subr.bf16.mxu0 0
    %294 = vmatpush1.bf16.msra.mxu0 %v277
    %295 = vmatprep.subr.bf16.mxu0 0
    %296 = vmatpush1.bf16.msra.mxu0 %v278
    %297 = vmatprep.subr.bf16.mxu0 0
    %298 = vmatpush1.bf16.msra.mxu0 %v279
    %299 = vmatprep.subr.bf16.mxu0 0
    %300 = vmatpush1.bf16.msra.mxu0 %v280
    %301 = vmatprep.subr.bf16.mxu0 0
    %302 = vmatpush1.bf16.msra.mxu0 %v281
    %303 = vmatprep.subr.bf16.mxu0 0
    %304 = vmatpush1.bf16.msra.mxu0 %v282
    %305 = vmatprep.subr.bf16.mxu0 0
    %306 = vmatpush1.bf16.msra.mxu0 %v283
    %307 = vmatprep.subr.bf16.mxu0 0
    %308 = vmatpush1.bf16.msra.mxu0 %v284
    %309 = vmatprep.subr.bf16.mxu0 0
    %310 = vmatpush1.bf16.msra.mxu0 0
    %311 = vmatprep.subr.bf16.mxu0 0
    %312 = vmatpush1.bf16.msra.mxu0 0
    %313 = vmatprep.subr.bf16.mxu0 0
    %314 = vmatpush1.bf16.msra.mxu0 0
    %315 = vmatprep.subr.bf16.mxu0 0
    %316 = vmatpush1.bf16.msra.mxu0 0
    %317 = vmatprep.subr.bf16.mxu0 0
    %318 = vmatpush1.bf16.msra.mxu0 0
    %319 = vmatprep.subr.bf16.mxu0 0
    %320 = vmatpush1.bf16.msra.mxu0 0
    %321 = vmatprep.subr.bf16.mxu0 0
    %322 = vmatpush1.bf16.msra.mxu0 0
    %323 = vmatprep.subr.bf16.mxu0 0
    %324 = vmatpush1.bf16.msra.mxu0 0
    %325 = vmatprep.mubr.bf16.mxu0 0
    %326 = vmatmul.mubr.bf16.gmra.mrb[0].mxu0 %v221
    %v327 = vpop.f32.mrb[0].mxu0
    %v328 = vadd.f32 %v243, %v327
    %v329 = vpop.f32.mrb[0].mxu0
    %v330 = vpop.f32.mrb[0].mxu0
    %v331 = vpop.f32.mrb[0].mxu0
    %332 = vdwg.mxu0
    %v333 = vmax.f32 %v328, 0.0
    %v334 = vpack.c.bf16 %v333, %v333
    %v335 = vld [vmem:[%s7] sm:$0xf]
    %v336 = vld [vmem:[%s7 + $0x4] sm:$0xf]
    %v337 = vld [vmem:[%s7 + $0x8] sm:$0xf]
    %v338 = vld [vmem:[%s7 + $0xc] sm:$0xf]
    %v339 = vld [vmem:[%s7 + $0x10] sm:$0xf]
    %v340 = vld [vmem:[%s7 + $0x14] sm:$0xf]
    %v341 = vld [vmem:[%s7 + $0x18] sm:$0xf]
    %v342 = vld [vmem:[%s7 + $0x1c] sm:$0xf]
    %v343 = vld [vmem:[%s8] sm:$0x1]
    %v345 = vlaneseq
    %v346 = vshrl.u32 %v345, 7
    %v347 = vsub.s32 0, %v346
    %v348 = vrot.slane %v343, %v347
    %v358 = vunpack.c.l.b16 %v335
    %v359 = vunpack.c.l.b16 %v336
    %v360 = vunpack.c.l.b16 %v337
    %v361 = vunpack.c.l.b16 %v338
    %v362 = vunpack.c.l.b16 %v339
    %v363 = vunpack.c.l.b16 %v340
    %v364 = vunpack.c.l.b16 %v341
    %v365 = vunpack.c.l.b16 %v342
    %v366 = vpack.c.b16 %v359, %v358
    %v367 = vpack.c.b16 %v361, %v360
    %v368 = vpack.c.b16 %v363, %v362
    %v369 = vpack.c.b16 %v365, %v364
    %vm374 = vcmask 523264
    %v376 = vsel %vm374, %v334, 0
    %378 = vmatprep.subr.bf16.mxu0 0
    %379 = vmatpush1.bf16.msra.mxu0 %v366
    %380 = vmatprep.subr.bf16.mxu0 0
    %381 = vmatpush1.bf16.msra.mxu0 %v367
    %382 = vmatprep.subr.bf16.mxu0 0
    %383 = vmatpush1.bf16.msra.mxu0 %v368
    %384 = vmatprep.subr.bf16.mxu0 0
    %385 = vmatpush1.bf16.msra.mxu0 %v369
    %386 = vmatprep.subr.bf16.mxu0 0
    %387 = vmatpush1.bf16.msra.mxu0 0
    %388 = vmatprep.subr.bf16.mxu0 0
    %389 = vmatpush1.bf16.msra.mxu0 0
    %390 = vmatprep.subr.bf16.mxu0 0
    %391 = vmatpush1.bf16.msra.mxu0 0
    %392 = vmatprep.subr.bf16.mxu0 0
    %393 = vmatpush1.bf16.msra.mxu0 0
    %394 = vmatprep.subr.bf16.mxu0 0
    %395 = vmatpush1.bf16.msra.mxu0 0
    %396 = vmatprep.subr.bf16.mxu0 0
    %397 = vmatpush1.bf16.msra.mxu0 0
    %398 = vmatprep.subr.bf16.mxu0 0
    %399 = vmatpush1.bf16.msra.mxu0 0
    %400 = vmatprep.subr.bf16.mxu0 0
    %401 = vmatpush1.bf16.msra.mxu0 0
    %402 = vmatprep.subr.bf16.mxu0 0
    %403 = vmatpush1.bf16.msra.mxu0 0
    %404 = vmatprep.subr.bf16.mxu0 0
    %405 = vmatpush1.bf16.msra.mxu0 0
    %406 = vmatprep.subr.bf16.mxu0 0
    %407 = vmatpush1.bf16.msra.mxu0 0
    %408 = vmatprep.subr.bf16.mxu0 0
    %409 = vmatpush1.bf16.msra.mxu0 0
    %410 = vmatprep.mubr.bf16.mxu0 0
    %411 = vmatmul.mubr.bf16.gmra.mrb[0].mxu0 %v376
    %v412 = vpop.f32.mrb[0].mxu0
    %v413 = vadd.f32 %v348, %v412
    %v414 = vpop.f32.mrb[0].mxu0
    %v415 = vpop.f32.mrb[0].mxu0
    %v416 = vpop.f32.mrb[0].mxu0
    %417 = vdwg.mxu0
    %v418 = vpack.c.bf16 %v413, %v413
    %419 = vst [vmem:[%s9] sm:$0xf] %v418
    // Predicated region
    $region42: #{agent_forward.1} parent=1 // pred_check
      _
    $region43: #{agent_forward.1} parent=1 // pred_check_branch
      %421 = sbr.rel (0) target = $region45
    $region44: #{agent_forward.1} parent=1 // pred_region
      _
    $region45: #{agent_forward.1} parent=1 // pred_fallthru
      _
    // Predicated region
    $region46: #{agent_forward.1} parent=1 // pred_check
      _
    $region47: #{agent_forward.1} parent=1 // pred_check_branch
      %423 = sbr.rel (0) target = $region49
    $region48: #{agent_forward.1} parent=1 // pred_region
      _
    $region49: #{agent_forward.1} parent=1 // pred_fallthru
      _
    %424 = vsyncpa [#allocation3], 1

</llo_original>
